<compile_context>
chip_gen: v5e
topology: v5e:2x2
jax: 0.10.0
libtpu: 0.0.40
codegen_flags: <defaults>
</compile_context>

<pallas_src>
import functools

import jax
import jax.numpy as jnp
import numpy as np
from jax.experimental import pallas as pl
from jax.experimental.pallas import tpu as pltpu

EPS = 1e-3


def _softplus(x):
    # numerically stable softplus (matches F.softplus default beta=1)
    return jnp.maximum(x, 0.0) + jnp.log1p(jnp.exp(-jnp.abs(x)))


def noisenet_kernel(hT_ref, w1t_ref, b1t_ref, w2st_ref, b2st_ref, p_ref,
                    out_ref, *, d):
    dd = d * d

    # MLP hot path, transposed: two MXU matmuls + tanh.  Batch is on lanes.
    x = hT_ref[...]                                           # (H, TB)
    z = jnp.tanh(jnp.dot(w1t_ref[...], x, preferred_element_type=jnp.float32)
                 + b1t_ref[...])                              # (H, TB)
    # Second linear with the tril scatter already folded into the weights
    # ((W2 @ S)^T): produces flattened L^T directly, off-tril rows exact 0.
    l_flat = (jnp.dot(w2st_ref[...], z, preferred_element_type=jnp.float32)
              + b2st_ref[...])                                # (dd, TB)

    # softplus + eps on diagonal entries only; in the (dd, TB) layout the
    # diagonal positions i*(d+1) are SUBLANE rows -> iota along dimension 0.
    row = jax.lax.broadcasted_iota(jnp.int32, l_flat.shape, 0)
    is_diag = (row % (d + 1)) == 0
    l_flat = jnp.where(is_diag, _softplus(l_flat) + EPS, l_flat)

    # out^T[i*d+k, b] = sum_j L[b,i,j] * L[b,k,j]
    # One stacked selection matmul produces (2*d*dd, TB):
    #   stacked[      j*dd + i*d + k, b] = L[b, i, j]
    #   stacked[d*dd + j*dd + i*d + k, b] = L[b, k, j]
    # The a/c split (offset d*dd = 64) and the j-group reduction (offsets
    # dd = 16, 32, 48) are all 8-aligned sublane slices -> no relayouts.
    stacked = jnp.dot(p_ref[...], l_flat,
                      preferred_element_type=jnp.float32)     # (2*d*dd, TB)
    a = stacked[0:d * dd, :]
    c = stacked[d * dd:2 * d * dd, :]
    prod = a * c                                              # (d*dd, TB)
    acc = prod[0:dd, :]
    for j in range(1, d):                                     # static, d tiny
        acc = acc + prod[j * dd:(j + 1) * dd, :]
    out_ref[...] = acc                                        # (dd, TB)


@functools.lru_cache(maxsize=None)
def _constants(d):
    """Scatter + stacked selection matrices, built once per d and cached."""
    m = d * (d + 1) // 2
    dd = d * d
    rows, cols = np.tril_indices(d)          # row-major, same as torch.tril_indices
    S = np.zeros((m, dd), np.float32)
    S[np.arange(m), rows * d + cols] = 1.0
    # Single stacked, transposed selector: (2*d*dd, dd).
    P = np.zeros((2 * d * dd, dd), np.float32)
    for j in range(d):
        for i in range(d):
            for k in range(d):
                r = j * dd + i * d + k
                P[r, i * d + j] = 1.0                  # first half  -> L[i, j]
                P[d * dd + r, k * d + j] = 1.0         # second half -> L[k, j]
    return jnp.asarray(S), jnp.asarray(P)


def prepare_params(w1, b1, w2, b2, d):
    """One-time per-weight-set prep: fold the tril scatter into the second
    linear layer and transpose everything for the batch-in-lanes layout."""
    S, P = _constants(d)
    w2s = jnp.asarray(w2) @ S                              # (H, d*d)
    b2s = jnp.asarray(b2).reshape(1, -1) @ S               # (1, d*d)
    return (jnp.asarray(w1).T,                             # (H, H)   W1^T
            jnp.asarray(b1).reshape(-1, 1),                # (H, 1)
            w2s.T,                                         # (d*d, H) (W2 S)^T
            b2s.T,                                         # (d*d, 1)
            P)                                             # (2*d*d*d, d*d)


def noise_net(h, params, d, *, tb=4096):
    """h:(B,H) f32, params from prepare_params -> (B, d, d)."""
    w1t, b1t, w2st, b2st, P = params
    B, H = h.shape
    dd = d * d

    # Layout plumbing: kernel wants batch on lanes.  In a full pipeline the
    # upstream layer should emit (H, B) directly; here we transpose once.
    hT = h.T

    # Batch (lane) tile selection.  TB must be a multiple of 128 or equal B.
    if B <= 256:
        TB = B                              # single block (== full dims, allowed)
    elif B <= tb:
        # >= 2 grid steps so the "parallel" axis lands on both v7x TensorCores.
        TB = ((pl.cdiv(B, 2) + 127) // 128) * 128
    else:
        TB = tb                             # tb is a multiple of 128
    # Non-divisible B: ragged last block — OOB input reads feed only garbage
    # columns (computation is per-column), OOB output writes are dropped.
    grid = pl.cdiv(B, TB)
    # VMEM per step at TB=4096: ~1 MiB h + 0.5 MiB out (double-buffered) +
    # ~3.5 MiB temps + tiny weights — far below every generation's limit.

    resident = lambda i: (0, 0)
    outT = pl.pallas_call(
        functools.partial(noisenet_kernel, d=d),
        out_shape=jax.ShapeDtypeStruct((dd, B), jnp.float32),
        grid_spec=pltpu.PrefetchScalarGridSpec(
            num_scalar_prefetch=0,
            grid=(grid,),
            in_specs=[
                pl.BlockSpec((H, TB), lambda i: (0, i)),     # h^T (pipelined)
                pl.BlockSpec((H, H), resident),              # W1^T (resident)
                pl.BlockSpec((H, 1), resident),              # b1^T
                pl.BlockSpec((dd, H), resident),             # (W2 S)^T
                pl.BlockSpec((dd, 1), resident),             # (b2 S)^T
                pl.BlockSpec((2 * d * dd, dd), resident),    # stacked selector
            ],
            out_specs=pl.BlockSpec((dd, TB), lambda i: (0, i)),
        ),
        compiler_params=pltpu.CompilerParams(
            dimension_semantics=("parallel",),   # batch axis -> shard across TCs
        ),
    )(hT, w1t, b1t, w2st, b2st, P)

    # (dd, B) -> (B, d, d); cheap layout plumbing outside the kernel.
    return outT.T.reshape(B, d, d)


def noise_net_ref(h, w1, b1, w2, b2, d):
    # pure-JAX reference mirroring the PyTorch module (unfolded weights)
    z = jnp.tanh(h @ w1 + b1)
    vec = z @ w2 + b2
    B = h.shape[0]
    rows, cols = np.tril_indices(d)
    L = jnp.zeros((B, d, d), jnp.float32).at[:, rows, cols].set(vec)
    diag = np.arange(d)
    L = L.at[:, diag, diag].set(jax.nn.softplus(L[:, diag, diag]) + EPS)
    return L @ jnp.swapaxes(L, -1, -2)


if __name__ == "__main__":
    B, H, D = 2, 32, 4                    # batch, hidden_dim, out_dim
    m = D * (D + 1) // 2
    key = jax.random.PRNGKey(0)
    k1, k2, k3, k4, k5 = jax.random.split(key, 5)
    h = jax.random.normal(k1, (B, H), jnp.float32)
    w1 = jax.random.normal(k2, (H, H), jnp.float32) / jnp.sqrt(H)
    b1 = jax.random.normal(k3, (1, H), jnp.float32) * 0.1
    w2 = jax.random.normal(k4, (H, m), jnp.float32) / jnp.sqrt(H)
    b2 = jax.random.normal(k5, (1, m), jnp.float32) * 0.1

    # One-time fold of the scatter + transposition for the lane-dense layout.
    params = prepare_params(w1, b1, w2, b2, D)

    out = noise_net(h, params, D)
    jax.block_until_ready(out)

    ref = noise_net_ref(h, w1, b1, w2, b2, D)
    np.testing.assert_allclose(np.asarray(out), np.asarray(ref),
                               atol=1e-4, rtol=1e-4)
    print("KERNEL_OK")
</pallas_src>

<mosaic_0001>
module attributes {stable_mosaic.version = 11 : i64} {
  func.func @noisenet_kernel(%arg0: i32, %arg1: memref<32x2xf32, #tpu.memory_space<vmem>>, %arg2: memref<32x32xf32, #tpu.memory_space<vmem>>, %arg3: memref<32x1xf32, #tpu.memory_space<vmem>>, %arg4: memref<16x32xf32, #tpu.memory_space<vmem>>, %arg5: memref<16x1xf32, #tpu.memory_space<vmem>>, %arg6: memref<128x16xf32, #tpu.memory_space<vmem>>, %arg7: memref<16x2xf32, #tpu.memory_space<vmem>>) attributes {dimension_semantics = [#tpu.dimension_semantics<parallel>], iteration_bounds = array<i64: 1>, scalar_prefetch = 0 : i64, scratch_operands = 0 : i64, tpu.core_type = #tpu.core_type<tc>, window_params = [{transform_indices = @transform_0, window_bounds = array<i64: 32, 2>}, {pipeline_mode = #tpu.pipeline_mode<synchronous>, transform_indices = @transform_1, window_bounds = array<i64: 32, 32>}, {pipeline_mode = #tpu.pipeline_mode<synchronous>, transform_indices = @transform_2, window_bounds = array<i64: 32, 1>}, {pipeline_mode = #tpu.pipeline_mode<synchronous>, transform_indices = @transform_3, window_bounds = array<i64: 16, 32>}, {pipeline_mode = #tpu.pipeline_mode<synchronous>, transform_indices = @transform_4, window_bounds = array<i64: 16, 1>}, {pipeline_mode = #tpu.pipeline_mode<synchronous>, transform_indices = @transform_5, window_bounds = array<i64: 128, 16>}, {transform_indices = @transform_6, window_bounds = array<i64: 16, 2>}]} {
    %c0 = arith.constant 0 : index
    %c0_0 = arith.constant 0 : index
    %0 = vector.load %arg1[%c0, %c0_0] : memref<32x2xf32, #tpu.memory_space<vmem>>, vector<32x2xf32>
    %c0_1 = arith.constant 0 : index
    %c0_2 = arith.constant 0 : index
    %1 = vector.load %arg2[%c0_1, %c0_2] : memref<32x32xf32, #tpu.memory_space<vmem>>, vector<32x32xf32>
    %cst = arith.constant dense<0.000000e+00> : vector<32x2xf32>
    %2 = tpu.matmul %1, %0, %cst {dimension_numbers = #tpu.dot_dimension_numbers<[1], [0], [0], [1], [0, 0, 1, 1], [], []>} : vector<32x32xf32>, vector<32x2xf32>, vector<32x2xf32> -> vector<32x2xf32>
    %c0_3 = arith.constant 0 : index
    %c0_4 = arith.constant 0 : index
    %3 = vector.load %arg3[%c0_3, %c0_4] : memref<32x1xf32, #tpu.memory_space<vmem>>, vector<32x1xf32>
    %4 = vector.broadcast %3 : vector<32x1xf32> to vector<32x2xf32>
    %5 = arith.addf %2, %4 : vector<32x2xf32>
    %6 = math.tanh %5 : vector<32x2xf32>
    %c0_5 = arith.constant 0 : index
    %c0_6 = arith.constant 0 : index
    %7 = vector.load %arg4[%c0_5, %c0_6] : memref<16x32xf32, #tpu.memory_space<vmem>>, vector<16x32xf32>
    %cst_7 = arith.constant dense<0.000000e+00> : vector<16x2xf32>
    %8 = tpu.matmul %7, %6, %cst_7 {dimension_numbers = #tpu.dot_dimension_numbers<[1], [0], [0], [1], [0, 0, 1, 1], [], []>} : vector<16x32xf32>, vector<32x2xf32>, vector<16x2xf32> -> vector<16x2xf32>
    %c0_8 = arith.constant 0 : index
    %c0_9 = arith.constant 0 : index
    %9 = vector.load %arg5[%c0_8, %c0_9] : memref<16x1xf32, #tpu.memory_space<vmem>>, vector<16x1xf32>
    %10 = vector.broadcast %9 : vector<16x1xf32> to vector<16x2xf32>
    %11 = arith.addf %8, %10 : vector<16x2xf32>
    %12 = tpu.iota {dimensions = array<i32: 0>} : vector<16x2xi32>
    %c5_i32 = arith.constant 5 : i32
    %c0_i32 = arith.constant 0 : i32
    %13 = arith.cmpi eq, %c5_i32, %c0_i32 : i32
    %c1_i32 = arith.constant 1 : i32
    %14 = arith.select %13, %c1_i32, %c5_i32 : i32
    %15 = vector.broadcast %14 : i32 to vector<16x2xi32>
    %16 = arith.remsi %12, %15 : vector<16x2xi32>
    %c0_i32_10 = arith.constant 0 : i32
    %17 = vector.broadcast %c0_i32_10 : i32 to vector<16x2xi32>
    %18 = arith.cmpi ne, %16, %17 : vector<16x2xi32>
    %c0_i32_11 = arith.constant 0 : i32
    %19 = vector.broadcast %c0_i32_11 : i32 to vector<16x2xi32>
    %20 = arith.cmpi slt, %16, %19 : vector<16x2xi32>
    %c0_i32_12 = arith.constant 0 : i32
    %21 = arith.cmpi slt, %14, %c0_i32_12 : i32
    %22 = vector.broadcast %21 : i1 to vector<16x2xi1>
    %23 = vector.broadcast %22 : vector<16x2xi1> to vector<16x2xi1>
    %24 = arith.xori %20, %23 : vector<16x2xi1>
    %25 = arith.andi %24, %18 : vector<16x2xi1>
    %26 = vector.broadcast %14 : i32 to vector<16x2xi32>
    %27 = arith.addi %16, %26 : vector<16x2xi32>
    %28 = arith.select %25, %27, %16 : vector<16x2xi1>, vector<16x2xi32>
    %c0_i32_13 = arith.constant 0 : i32
    %29 = vector.broadcast %c0_i32_13 : i32 to vector<16x2xi32>
    %30 = arith.cmpi eq, %28, %29 : vector<16x2xi32>
    %cst_14 = arith.constant 0.000000e+00 : f32
    %31 = vector.broadcast %cst_14 : f32 to vector<16x2xf32>
    %32 = arith.maximumf %11, %31 : vector<16x2xf32>
    %33 = math.absf %11 : vector<16x2xf32>
    %cst_15 = arith.constant 0.000000e+00 : f32
    %34 = vector.broadcast %cst_15 : f32 to vector<16x2xf32>
    %35 = arith.subf %34, %33 : vector<16x2xf32>
    %36 = math.exp %35 : vector<16x2xf32>
    %37 = math.log1p %36 : vector<16x2xf32>
    %38 = arith.addf %32, %37 : vector<16x2xf32>
    %cst_16 = arith.constant 1.000000e-03 : f32
    %39 = vector.broadcast %cst_16 : f32 to vector<16x2xf32>
    %40 = arith.addf %38, %39 : vector<16x2xf32>
    %41 = arith.select %30, %40, %11 : vector<16x2xi1>, vector<16x2xf32>
    %c0_17 = arith.constant 0 : index
    %c0_18 = arith.constant 0 : index
    %42 = vector.load %arg6[%c0_17, %c0_18] : memref<128x16xf32, #tpu.memory_space<vmem>>, vector<128x16xf32>
    %cst_19 = arith.constant dense<0.000000e+00> : vector<128x2xf32>
    %43 = tpu.matmul %42, %41, %cst_19 {dimension_numbers = #tpu.dot_dimension_numbers<[1], [0], [0], [1], [0, 0, 1, 1], [], []>} : vector<128x16xf32>, vector<16x2xf32>, vector<128x2xf32> -> vector<128x2xf32>
    %44 = vector.extract_strided_slice %43 {offsets = [0, 0], sizes = [64, 2], strides = [1, 1]} : vector<128x2xf32> to vector<64x2xf32>
    %45 = vector.extract_strided_slice %43 {offsets = [64, 0], sizes = [64, 2], strides = [1, 1]} : vector<128x2xf32> to vector<64x2xf32>
    %46 = arith.mulf %44, %45 : vector<64x2xf32>
    %47 = vector.extract_strided_slice %46 {offsets = [0, 0], sizes = [16, 2], strides = [1, 1]} : vector<64x2xf32> to vector<16x2xf32>
    %48 = vector.extract_strided_slice %46 {offsets = [16, 0], sizes = [16, 2], strides = [1, 1]} : vector<64x2xf32> to vector<16x2xf32>
    %49 = arith.addf %47, %48 : vector<16x2xf32>
    %50 = vector.extract_strided_slice %46 {offsets = [32, 0], sizes = [16, 2], strides = [1, 1]} : vector<64x2xf32> to vector<16x2xf32>
    %51 = arith.addf %49, %50 : vector<16x2xf32>
    %52 = vector.extract_strided_slice %46 {offsets = [48, 0], sizes = [16, 2], strides = [1, 1]} : vector<64x2xf32> to vector<16x2xf32>
    %53 = arith.addf %51, %52 : vector<16x2xf32>
    %c0_20 = arith.constant 0 : index
    %c0_21 = arith.constant 0 : index
    %54 = vector.load %arg7[%c0_20, %c0_21] : memref<16x2xf32, #tpu.memory_space<vmem>>, vector<16x2xf32>
    tpu.vector_store %arg7[%c0_20, %c0_21], %53 {strides = array<i32>} : memref<16x2xf32, #tpu.memory_space<vmem>>, vector<16x2xf32>,
    return
  }
  func.func @transform_0(%arg0: i32) -> (i32, i32) {
    %c0_i32 = arith.constant 0 : i32
    %c0_i32_0 = arith.constant 0 : i32
    return %c0_i32, %arg0 : i32, i32
  }
  func.func @transform_1(%arg0: i32) -> (i32, i32) {
    %c0_i32 = arith.constant 0 : i32
    %c0_i32_0 = arith.constant 0 : i32
    %c0_i32_1 = arith.constant 0 : i32
    return %c0_i32, %c0_i32_0 : i32, i32
  }
  func.func @transform_2(%arg0: i32) -> (i32, i32) {
    %c0_i32 = arith.constant 0 : i32
    %c0_i32_0 = arith.constant 0 : i32
    %c0_i32_1 = arith.constant 0 : i32
    return %c0_i32, %c0_i32_0 : i32, i32
  }
  func.func @transform_3(%arg0: i32) -> (i32, i32) {
    %c0_i32 = arith.constant 0 : i32
    %c0_i32_0 = arith.constant 0 : i32
    %c0_i32_1 = arith.constant 0 : i32
    return %c0_i32, %c0_i32_0 : i32, i32
  }
  func.func @transform_4(%arg0: i32) -> (i32, i32) {
    %c0_i32 = arith.constant 0 : i32
    %c0_i32_0 = arith.constant 0 : i32
    %c0_i32_1 = arith.constant 0 : i32
    return %c0_i32, %c0_i32_0 : i32, i32
  }
  func.func @transform_5(%arg0: i32) -> (i32, i32) {
    %c0_i32 = arith.constant 0 : i32
    %c0_i32_0 = arith.constant 0 : i32
    %c0_i32_1 = arith.constant 0 : i32
    return %c0_i32, %c0_i32_0 : i32, i32
  }
  func.func @transform_6(%arg0: i32) -> (i32, i32) {
    %c0_i32 = arith.constant 0 : i32
    %c0_i32_0 = arith.constant 0 : i32
    return %c0_i32, %arg0 : i32, i32
  }
}

</mosaic_0001>

<llo_original>
// kernel: tpu_custom_call.1
$region0: #{tpu_custom_call.1}
  #allocation0 [shape = 'u32[]', space=smem, size = 0x4, offset = 0x4, fixed_abs, tag = 'smem constant byte address 0x4 - core index']
  #allocation1 [shape = 'u32[72,128]{1,0:T(1,128)}', space=vmem, size = 0x9000, scoped, tag = 'internal scratch']
  %s0 = inlined_call_operand.vmem [shape: f32[32,2], index: 0, kind: input, shape index: {}]
  %s1 = inlined_call_operand.vmem [shape: f32[32,32], index: 1, kind: input, shape index: {}]
  %s2 = inlined_call_operand.vmem [shape: f32[32,1], index: 2, kind: input, shape index: {}]
  %s3 = inlined_call_operand.vmem [shape: f32[16,32], index: 3, kind: input, shape index: {}]
  %s4 = inlined_call_operand.vmem [shape: f32[16,1], index: 4, kind: input, shape index: {}]
  %s5 = inlined_call_operand.vmem [shape: f32[128,16], index: 5, kind: input, shape index: {}]
  %s6 = inlined_call_operand.vmem [shape: f32[16,2], index: 6, kind: output, shape index: {}]
  %s7 = sld [smem:[#allocation0]]
  $region34: #{tpu_custom_call.1} parent=0
    _
  %s9 = ssub.s32 1, %s7
  %s10 = scalar_select 0, %s9, %s7
  // Predicated region
  $region2: #{tpu_custom_call.1} parent=0 // pred_check
    _
  $region3: #{tpu_custom_call.1} parent=0 // pred_check_branch
    %12 = sbr.rel (0) target = $region5
  $region4: #{tpu_custom_call.1} parent=0 // pred_region
    _
  $region5: #{tpu_custom_call.1} parent=0 // pred_fallthru
    _
  // Predicated region
  $region6: #{tpu_custom_call.1} parent=0 // pred_check
    _
  $region7: #{tpu_custom_call.1} parent=0 // pred_check_branch
    %14 = sbr.rel (0) target = $region9
  $region8: #{tpu_custom_call.1} parent=0 // pred_region
    _
  $region9: #{tpu_custom_call.1} parent=0 // pred_fallthru
    _
  // Predicated region
  $region10: #{tpu_custom_call.1} parent=0 // pred_check
    _
  $region11: #{tpu_custom_call.1} parent=0 // pred_check_branch
    %16 = sbr.rel (0) target = $region13
  $region12: #{tpu_custom_call.1} parent=0 // pred_region
    _
  $region13: #{tpu_custom_call.1} parent=0 // pred_fallthru
    _
  // Predicated region
  $region14: #{tpu_custom_call.1} parent=0 // pred_check
    _
  $region15: #{tpu_custom_call.1} parent=0 // pred_check_branch
    %18 = sbr.rel (0) target = $region17
  $region16: #{tpu_custom_call.1} parent=0 // pred_region
    _
  $region17: #{tpu_custom_call.1} parent=0 // pred_fallthru
    _
  // Predicated region
  $region18: #{tpu_custom_call.1} parent=0 // pred_check
    _
  $region19: #{tpu_custom_call.1} parent=0 // pred_check_branch
    %20 = sbr.rel (0) target = $region21
  $region20: #{tpu_custom_call.1} parent=0 // pred_region
    _
  $region21: #{tpu_custom_call.1} parent=0 // pred_fallthru
    _
  // Predicated region
  $region22: #{tpu_custom_call.1} parent=0 // pred_check
    _
  $region23: #{tpu_custom_call.1} parent=0 // pred_check_branch
    %22 = sbr.rel (0) target = $region25
  $region24: #{tpu_custom_call.1} parent=0 // pred_region
    _
  $region25: #{tpu_custom_call.1} parent=0 // pred_fallthru
    _
  %v23 = vld [vmem:[%s0] sm:$0xff]
  %v24 = vld [vmem:[%s0 + $0x8] sm:$0xff]
  %v25 = vld [vmem:[%s0 + $0x10] sm:$0xff]
  %v26 = vld [vmem:[%s0 + $0x18] sm:$0xff]
  %v27 = vld [vmem:[%s1] sm:$0xff]
  %v28 = vld [vmem:[%s1 + $0x8] sm:$0xff]
  %v29 = vld [vmem:[%s1 + $0x10] sm:$0xff]
  %v30 = vld [vmem:[%s1 + $0x18] sm:$0xff]
  %v31 = vld [vmem:[%s2] sm:$0xff]
  %v32 = vld [vmem:[%s2 + $0x8] sm:$0xff]
  %v33 = vld [vmem:[%s2 + $0x10] sm:$0xff]
  %v34 = vld [vmem:[%s2 + $0x18] sm:$0xff]
  %36 = vset.pattern.permute.xlu0 0
  %37 = vperm.xlu0 %36, %v31
  %v38 = vpop.permute.xlu0 %37
  %41 = vset.pattern.permute.xlu0 0
  %42 = vperm.xlu0 %41, %v32
  %v43 = vpop.permute.xlu0 %42
  %46 = vset.pattern.permute.xlu0 0
  %47 = vperm.xlu0 %46, %v33
  %v48 = vpop.permute.xlu0 %47
  %51 = vset.pattern.permute.xlu0 0
  %52 = vperm.xlu0 %51, %v34
  %v53 = vpop.permute.xlu0 %52
  %vm55 = vcmask 261120
  %v57 = vsel %vm55, %v27, 0
  %v60 = vsel %vm55, %v28, 0
  %v63 = vsel %vm55, %v29, 0
  %v66 = vsel %vm55, %v30, 0
  %68 = vmatpush.msra.mxu0 0.0
  %69 = vmatpush.msra.mxu0 0.0
  %70 = vmatpush.msra.mxu0 0.0
  %71 = vmatpush.msra.mxu0 0.0
  %72 = vmatpush.msra.mxu0 0.0
  %73 = vmatpush.msra.mxu0 0.0
  %74 = vmatpush.msra.mxu0 0.0
  %75 = vmatpush.msra.mxu0 0.0
  %76 = vmatpush.msra.mxu0 0.0
  %77 = vmatpush.msra.mxu0 0.0
  %78 = vmatpush.msra.mxu0 0.0
  %79 = vmatpush.msra.mxu0 0.0
  %80 = vmatpush.msra.mxu0 %v26
  %81 = vmatpush.msra.mxu0 %v25
  %82 = vmatpush.msra.mxu0 %v24
  %83 = vmatpush.msra.mxu0 %v23
  %84 = vmatmul.f32.gmra.mxu0 %v57
  %v85 = vpop.f32.mrf.mxu0
  %v86 = vadd.f32 %v38, %v85
  %87 = vmatmul.f32.gmra.mxu0 %v60
  %v88 = vpop.f32.mrf.mxu0
  %v89 = vadd.f32 %v43, %v88
  %90 = vmatmul.f32.gmra.mxu0 %v63
  %v91 = vpop.f32.mrf.mxu0
  %v92 = vadd.f32 %v48, %v91
  %93 = vmatmul.f32.gmra.mxu0 %v66
  %v94 = vpop.f32.mrf.mxu0
  %v95 = vadd.f32 %v53, %v94
  %96 = vdwg.mxu0
  %v97 = vtanh.pop %v86
  %v98 = vtanh.pop %v89
  %v99 = vtanh.pop %v92
  %v100 = vtanh.pop %v95
  %v101 = vld [vmem:[%s3] sm:$0xff]
  %v102 = vld [vmem:[%s3 + $0x8] sm:$0xff]
  %v103 = vld [vmem:[%s4] sm:$0xff]
  %v104 = vld [vmem:[%s4 + $0x8] sm:$0xff]
  %106 = vset.pattern.permute.xlu0 0
  %107 = vperm.xlu0 %106, %v103
  %v108 = vpop.permute.xlu0 %107
  %111 = vset.pattern.permute.xlu0 0
  %112 = vperm.xlu0 %111, %v104
  %v113 = vpop.permute.xlu0 %112
  %v116 = vsel %vm55, %v101, 0
  %v119 = vsel %vm55, %v102, 0
  %121 = vmatpush.msra.mxu0 0.0
  %122 = vmatpush.msra.mxu0 0.0
  %123 = vmatpush.msra.mxu0 0.0
  %124 = vmatpush.msra.mxu0 0.0
  %125 = vmatpush.msra.mxu0 0.0
  %126 = vmatpush.msra.mxu0 0.0
  %127 = vmatpush.msra.mxu0 0.0
  %128 = vmatpush.msra.mxu0 0.0
  %129 = vmatpush.msra.mxu0 0.0
  %130 = vmatpush.msra.mxu0 0.0
  %131 = vmatpush.msra.mxu0 0.0
  %132 = vmatpush.msra.mxu0 0.0
  %133 = vmatpush.msra.mxu0 %v100
  %134 = vmatpush.msra.mxu0 %v99
  %135 = vmatpush.msra.mxu0 %v98
  %136 = vmatpush.msra.mxu0 %v97
  %137 = vmatmul.f32.gmra.mxu0 %v116
  %v138 = vpop.f32.mrf.mxu0
  %v139 = vadd.f32 %v108, %v138
  %140 = vmatmul.f32.gmra.mxu0 %v119
  %v141 = vpop.f32.mrf.mxu0
  %v142 = vadd.f32 %v113, %v141
  %143 = vdwg.mxu0
  %v144 = vlaneseq
  %v145 = vshrl.u32 %v144, 7
  %v146 = vadd.s32 %v145, 8
  %vm147 = vcmp.lt.s32.totalorder %v145, 0
  %v148 = vsub.s32 0, %v145
  %v149 = vsel %vm147, %v148, %v145
  %v150 = vand.u32 %v149, 65535
  %v151 = vshrl.u32 %v149, 16
  %v153 = vmul.u32 %v150, 52429
  %v154 = vmul.u32 %v150, 52428
  %v155 = vmul.u32 %v151, 52429
  %v156 = vmul.u32 %v151, 52428
  %v157 = vshll.u32 %v154, 16
  %v158 = vshrl.u32 %v154, 16
  %v159 = vshll.u32 %v155, 16
  %v160 = vshrl.u32 %v155, 16
  %vm161 = vc.u32 %v153, %v157
  %v162 = vsel %vm161, 1, 0
  %v163 = vadd.s32 %v153, %v157
  %v164 = vadd.s32 %v156, %v162
  %vm165 = vc.u32 %v163, %v159
  %v166 = vsel %vm165, 1, 0
  %v167 = vadd.s32 %v163, %v159
  %v168 = vadd.s32 %v164, %v166
  %v169 = vadd.s32 %v168, %v158
  %v170 = vadd.s32 %v169, %v160
  %v171 = vshrl.u32 %v170, 2
  %v172 = vmul.u32 %v171, 5
  %v173 = vsub.s32 %v149, %v172
  %v174 = vsub.s32 0, %v173
  %v175 = vsel %vm147, %v174, %v173
  %vm176 = vcmp.lt.s32.totalorder %v146, 0
  %v177 = vsub.s32 0, %v146
  %v178 = vsel %vm176, %v177, %v146
  %v179 = vand.u32 %v178, 65535
  %v180 = vshrl.u32 %v178, 16
  %v182 = vmul.u32 %v179, 52429
  %v183 = vmul.u32 %v179, 52428
  %v184 = vmul.u32 %v180, 52429
  %v185 = vmul.u32 %v180, 52428
  %v186 = vshll.u32 %v183, 16
  %v187 = vshrl.u32 %v183, 16
  %v188 = vshll.u32 %v184, 16
  %v189 = vshrl.u32 %v184, 16
  %vm190 = vc.u32 %v182, %v186
  %v191 = vsel %vm190, 1, 0
  %v192 = vadd.s32 %v182, %v186
  %v193 = vadd.s32 %v185, %v191
  %vm194 = vc.u32 %v192, %v188
  %v195 = vsel %vm194, 1, 0
  %v196 = vadd.s32 %v192, %v188
  %v197 = vadd.s32 %v193, %v195
  %v198 = vadd.s32 %v197, %v187
  %v199 = vadd.s32 %v198, %v189
  %v200 = vshrl.u32 %v199, 2
  %v201 = vmul.u32 %v200, 5
  %v202 = vsub.s32 %v178, %v201
  %v203 = vsub.s32 0, %v202
  %v204 = vsel %vm176, %v203, %v202
  %vm205 = vcmp.ne.s32.totalorder %v175, 0
  %vm206 = vcmp.ne.s32.totalorder %v204, 0
  %vm207 = vcmp.lt.s32.totalorder %v175, 0
  %vm208 = vcmp.lt.s32.totalorder %v204, 0
  %vm209 = vmand %vm207, %vm205
  %vm210 = vmand %vm208, %vm206
  %v211 = vadd.s32 %v175, 5
  %v212 = vadd.s32 %v204, 5
  %v213 = vsel %vm209, %v211, %v175
  %v214 = vsel %vm210, %v212, %v204
  %vm215 = vcmp.eq.s32.totalorder %v213, 0
  %vm216 = vcmp.eq.s32.totalorder %v214, 0
  %v217 = vmax.f32 %v139, 0.0
  %v218 = vmax.f32 %v142, 0.0
  %v219 = vand.u32 2147483647, %v139
  %v220 = vand.u32 2147483647, %v142
  %v221 = vsub.f32 0.0, %v219
  %v222 = vsub.f32 0.0, %v220
  %v223 = vmul.f32 %v221, 1.442695
  %v224 = vpow.pop %v223
  %v225 = vmul.f32 %v222, 1.442695
  %v226 = vpow.pop %v225
  %v227 = vadd.f32 %v224, 1.0
  %v228 = vlog2.pop %v227
  %v229 = vmul.f32 %v228, 0.6931472
  %v230 = vmul.f32 -0.5, %v224
  %v231 = vadd.f32 %v230, 1.0
  %v232 = vmul.f32 %v231, %v224
  %v233 = vand.u32 2147483647, %v224
  %vm234 = vcmp.lt.f32.partialorder %v233, 0.0004427343
  %v235 = vsel %vm234, %v232, %v229
  %v236 = vadd.f32 %v226, 1.0
  %v237 = vlog2.pop %v236
  %v238 = vmul.f32 %v237, 0.6931472
  %v239 = vmul.f32 -0.5, %v226
  %v240 = vadd.f32 %v239, 1.0
  %v241 = vmul.f32 %v240, %v226
  %v242 = vand.u32 2147483647, %v226
  %vm243 = vcmp.lt.f32.partialorder %v242, 0.0004427343
  %v244 = vsel %vm243, %v241, %v238
  %v245 = vadd.f32 %v217, %v235
  %v246 = vadd.f32 %v218, %v244
  %v247 = vadd.f32 %v245, 0.001
  %v248 = vadd.f32 %v246, 0.001
  %v249 = vsel %vm215, %v247, %v139
  %v250 = vsel %vm216, %v248, %v142
  %v251 = vld [vmem:[%s5] sm:$0xff]
  %v252 = vld [vmem:[%s5 + $0x8] sm:$0xff]
  %v253 = vld [vmem:[%s5 + $0x10] sm:$0xff]
  %v254 = vld [vmem:[%s5 + $0x18] sm:$0xff]
  %v255 = vld [vmem:[%s5 + $0x20] sm:$0xff]
  %v256 = vld [vmem:[%s5 + $0x28] sm:$0xff]
  %v257 = vld [vmem:[%s5 + $0x30] sm:$0xff]
  %v258 = vld [vmem:[%s5 + $0x38] sm:$0xff]
  %v259 = vld [vmem:[%s5 + $0x40] sm:$0xff]
  %v260 = vld [vmem:[%s5 + $0x48] sm:$0xff]
  %v261 = vld [vmem:[%s5 + $0x50] sm:$0xff]
  %v262 = vld [vmem:[%s5 + $0x58] sm:$0xff]
  %v263 = vld [vmem:[%s5 + $0x60] sm:$0xff]
  %v264 = vld [vmem:[%s5 + $0x68] sm:$0xff]
  %v265 = vld [vmem:[%s5 + $0x70] sm:$0xff]
  %v266 = vld [vmem:[%s5 + $0x78] sm:$0xff]
  %vm267 = vcmask 130048
  %v269 = vsel %vm267, %v251, 0
  %v272 = vsel %vm267, %v252, 0
  %v275 = vsel %vm267, %v253, 0
  %v278 = vsel %vm267, %v254, 0
  %v281 = vsel %vm267, %v255, 0
  %v284 = vsel %vm267, %v256, 0
  %v287 = vsel %vm267, %v257, 0
  %v290 = vsel %vm267, %v258, 0
  %v293 = vsel %vm267, %v259, 0
  %v296 = vsel %vm267, %v260, 0
  %v299 = vsel %vm267, %v261, 0
  %v302 = vsel %vm267, %v262, 0
  %v305 = vsel %vm267, %v263, 0
  %v308 = vsel %vm267, %v264, 0
  %v311 = vsel %vm267, %v265, 0
  %v314 = vsel %vm267, %v266, 0
  %316 = vmatpush.msra.mxu0 0.0
  %317 = vmatpush.msra.mxu0 0.0
  %318 = vmatpush.msra.mxu0 0.0
  %319 = vmatpush.msra.mxu0 0.0
  %320 = vmatpush.msra.mxu0 0.0
  %321 = vmatpush.msra.mxu0 0.0
  %322 = vmatpush.msra.mxu0 0.0
  %323 = vmatpush.msra.mxu0 0.0
  %324 = vmatpush.msra.mxu0 0.0
  %325 = vmatpush.msra.mxu0 0.0
  %326 = vmatpush.msra.mxu0 0.0
  %327 = vmatpush.msra.mxu0 0.0
  %328 = vmatpush.msra.mxu0 0.0
  %329 = vmatpush.msra.mxu0 0.0
  %330 = vmatpush.msra.mxu0 %v250
  %331 = vmatpush.msra.mxu0 %v249
  %332 = vmatmul.f32.gmra.mxu0 %v269
  %v333 = vpop.f32.mrf.mxu0
  %v334 = vadd.f32 0.0, %v333
  %335 = vmatmul.f32.gmra.mxu0 %v272
  %v336 = vpop.f32.mrf.mxu0
  %v337 = vadd.f32 0.0, %v336
  %338 = vmatmul.f32.gmra.mxu0 %v275
  %v339 = vpop.f32.mrf.mxu0
  %v340 = vadd.f32 0.0, %v339
  %341 = vmatmul.f32.gmra.mxu0 %v278
  %v342 = vpop.f32.mrf.mxu0
  %v343 = vadd.f32 0.0, %v342
  %344 = vmatmul.f32.gmra.mxu0 %v281
  %v345 = vpop.f32.mrf.mxu0
  %v346 = vadd.f32 0.0, %v345
  %347 = vmatmul.f32.gmra.mxu0 %v284
  %v348 = vpop.f32.mrf.mxu0
  %v349 = vadd.f32 0.0, %v348
  %350 = vmatmul.f32.gmra.mxu0 %v287
  %v351 = vpop.f32.mrf.mxu0
  %v352 = vadd.f32 0.0, %v351
  %353 = vmatmul.f32.gmra.mxu0 %v290
  %v354 = vpop.f32.mrf.mxu0
  %v355 = vadd.f32 0.0, %v354
  %356 = vmatmul.f32.gmra.mxu0 %v293
  %v357 = vpop.f32.mrf.mxu0
  %v358 = vadd.f32 0.0, %v357
  %359 = vmatmul.f32.gmra.mxu0 %v296
  %v360 = vpop.f32.mrf.mxu0
  %v361 = vadd.f32 0.0, %v360
  %362 = vmatmul.f32.gmra.mxu0 %v299
  %v363 = vpop.f32.mrf.mxu0
  %v364 = vadd.f32 0.0, %v363
  %365 = vmatmul.f32.gmra.mxu0 %v302
  %v366 = vpop.f32.mrf.mxu0
  %v367 = vadd.f32 0.0, %v366
  %368 = vmatmul.f32.gmra.mxu0 %v305
  %v369 = vpop.f32.mrf.mxu0
  %v370 = vadd.f32 0.0, %v369
  %371 = vmatmul.f32.gmra.mxu0 %v308
  %v372 = vpop.f32.mrf.mxu0
  %v373 = vadd.f32 0.0, %v372
  %374 = vmatmul.f32.gmra.mxu0 %v311
  %v375 = vpop.f32.mrf.mxu0
  %v376 = vadd.f32 0.0, %v375
  %377 = vmatmul.f32.gmra.mxu0 %v314
  %v378 = vpop.f32.mrf.mxu0
  %v379 = vadd.f32 0.0, %v378
  %380 = vdwg.mxu0
  %v381 = vmul.f32 %v334, %v358
  %v382 = vmul.f32 %v337, %v361
  %v383 = vmul.f32 %v340, %v364
  %v384 = vmul.f32 %v343, %v367
  %v385 = vmul.f32 %v346, %v370
  %v386 = vmul.f32 %v349, %v373
  %v387 = vmul.f32 %v352, %v376
  %v388 = vmul.f32 %v355, %v379
  %v389 = vadd.f32 %v381, %v383
  %v390 = vadd.f32 %v382, %v384
  %v391 = vadd.f32 %v389, %v385
  %v392 = vadd.f32 %v390, %v386
  %v393 = vadd.f32 %v391, %v387
  %v394 = vadd.f32 %v392, %v388
  %vm395 = vcmask 15360
  %396 = vst.msk [vmem:[%s6] sm:$0xff] %vm395, %v393
  %397 = vst.msk [vmem:[%s6 + $0x8] sm:$0xff] %vm395, %v394
  // Predicated region
  $region26: #{tpu_custom_call.1} parent=0 // pred_check
    _
  $region27: #{tpu_custom_call.1} parent=0 // pred_check_branch
    %399 = sbr.rel (0) target = $region29
  $region28: #{tpu_custom_call.1} parent=0 // pred_region
    _
  $region29: #{tpu_custom_call.1} parent=0 // pred_fallthru
    _
  // Predicated region
  $region30: #{tpu_custom_call.1} parent=0 // pred_check
    _
  $region31: #{tpu_custom_call.1} parent=0 // pred_check_branch
    %401 = sbr.rel (0) target = $region33
  $region32: #{tpu_custom_call.1} parent=0 // pred_region
    _
  $region33: #{tpu_custom_call.1} parent=0 // pred_fallthru
    _

</llo_original>
